<compile_context>
chip_gen: v5e
topology: v5e:2x2
jax: 0.10.0
libtpu: 0.0.40
codegen_flags: <defaults>
</compile_context>

<pallas_src>
import jax
import jax.numpy as jnp
from jax.experimental import pallas as pl
from jax.experimental.pallas import tpu as pltpu


_MIN = 1e-4
_MAX = 1e4

_LANE_COLS = 512                         # lane-dense last dim (multiple of 128)
_TARGET_TILE_BYTES = 4 * 1024 * 1024     # ~4 MiB per array per grid step
_SMALL_FALLBACK_ELEMS = 64 * 1024        # below this, plain XLA is faster
_VMEM_LIMIT_BYTES = 32 * 1024 * 1024     # fits v5e/v6e/v7x scoped-VMEM budgets


def _disp_act_kernel(x_ref, o_ref):
    # Upcast to f32 for the transcendental path (exact for f32 inputs, explicit
    # widening for bf16 on v5e which has no bf16 VPU/EUP). exp/log1p go to the
    # EUP slot, max/abs/clip are cheap VPU work — the kernel stays HBM-bound.
    x = x_ref[...].astype(jnp.float32)
    sp = jnp.maximum(x, 0.0) + jnp.log1p(jnp.exp(-jnp.abs(x)))  # stable softplus
    o_ref[...] = jnp.clip(sp, _MIN, _MAX).astype(o_ref.dtype)


def _round_up(v: int, m: int) -> int:
    return ((v + m - 1) // m) * m


def disp_act(x: jax.Array) -> jax.Array:
    """clamp(softplus(x), 1e-4, 1e4), elementwise (torch.clamp(F.softplus(x), ...))."""
    orig_shape = x.shape
    orig_dtype = x.dtype
    total = int(x.size)

    if total == 0:
        return x
    if total < _SMALL_FALLBACK_ELEMS:
        # Launch + reshape overhead dominates for dispersion-head-sized tensors.
        return jnp.clip(jax.nn.softplus(x), _MIN, _MAX).astype(orig_dtype)

    cols = _LANE_COLS
    itemsize = jnp.dtype(orig_dtype).itemsize
    sublane = max(8, 32 // itemsize)  # 8 (f32), 16 (bf16), 32 (int8/fp8)

    # Pad-free fast path whenever total is a multiple of the lane width;
    # otherwise pad only to the next multiple of cols (<= cols-1 elements).
    flat = x.reshape(-1)
    rem = total % cols
    padded = rem != 0
    if padded:
        flat = jnp.pad(flat, (0, cols - rem))
    rows = flat.size // cols
    x2d = flat.reshape(rows, cols)

    # Tile rows: ~_TARGET_TILE_BYTES per array per step, rounded to the packed
    # sublane granule. For inputs that would fit in one block, split into ~2
    # blocks so both v7x TensorCores get grid steps under ("parallel",).
    max_tile_rows = max(
        sublane, (_TARGET_TILE_BYTES // (cols * itemsize)) // sublane * sublane
    )
    if rows > max_tile_rows:
        tile_rows = max_tile_rows
    else:
        tile_rows = max(sublane, _round_up(pl.cdiv(rows, 2), sublane))
    grid = (pl.cdiv(rows, tile_rows),)  # partial last block handled by masking

    out2d = pl.pallas_call(
        _disp_act_kernel,
        out_shape=jax.ShapeDtypeStruct((rows, cols), orig_dtype),
        grid_spec=pltpu.PrefetchScalarGridSpec(
            num_scalar_prefetch=0,
            grid=grid,
            in_specs=[pl.BlockSpec((tile_rows, cols), lambda i: (i, 0))],
            out_specs=pl.BlockSpec((tile_rows, cols), lambda i: (i, 0)),
        ),
        compiler_params=pltpu.CompilerParams(
            # Single streaming axis; "parallel" lets v7x shard it across its
            # 2 TensorCores (no-op on v5e/v6e).
            dimension_semantics=("parallel",),
            vmem_limit_bytes=_VMEM_LIMIT_BYTES,
        ),
        cost_estimate=pl.CostEstimate(
            flops=5 * total,
            transcendentals=2 * total,
            bytes_accessed=2 * total * itemsize,
        ),
    )(x2d)

    if padded:
        return out2d.reshape(-1)[:total].reshape(orig_shape)
    return out2d.reshape(orig_shape)


if __name__ == "__main__":
    key = jax.random.PRNGKey(0)
    k1, k2, k3 = jax.random.split(key, 3)

    # 1) Small NCHW-like input consistent with where DispAct is used
    #    (post-linear dispersion head) — takes the small-input XLA fallback.
    x = jax.random.normal(k1, (2, 4, 16, 16), dtype=jnp.float32) * 3.0
    y = disp_act(x)

    # 2) Medium lane-aligned input — exercises the pad-free Pallas path
    #    (256 rows x 512 cols, 2 grid steps).
    x_big = jax.random.normal(k2, (2, 4, 128, 128), dtype=jnp.float32) * 3.0
    y_big = disp_act(x_big)

    # 3) Ragged input — exercises the minimal-pad path with a masked partial
    #    final row-block.
    x_ragged = jax.random.normal(k3, (257, 257), dtype=jnp.float32) * 3.0
    y_ragged = disp_act(x_ragged)

    jax.block_until_ready((y, y_big, y_ragged))

    def ref(a):
        return jnp.clip(jax.nn.softplus(a), _MIN, _MAX)

    for xin, yout in ((x, y), (x_big, y_big), (x_ragged, y_ragged)):
        assert yout.shape == xin.shape and yout.dtype == xin.dtype
        assert jnp.allclose(yout, ref(xin), rtol=1e-6, atol=1e-6)

    print("KERNEL_OK")
</pallas_src>

<mosaic_0001>
module attributes {stable_mosaic.version = 11 : i64} {
  func.func @_disp_act_kernel(%arg0: i32, %arg1: memref<128x512xf32, #tpu.memory_space<vmem>>, %arg2: memref<128x512xf32, #tpu.memory_space<vmem>>) attributes {dimension_semantics = [#tpu.dimension_semantics<parallel>], iteration_bounds = array<i64: 2>, scalar_prefetch = 0 : i64, scratch_operands = 0 : i64, tpu.core_type = #tpu.core_type<tc>, window_params = [{transform_indices = @transform_0, window_bounds = array<i64: 128, 512>}, {transform_indices = @transform_1, window_bounds = array<i64: 128, 512>}]} {
    %c0 = arith.constant 0 : index
    %c0_0 = arith.constant 0 : index
    %0 = vector.load %arg1[%c0, %c0_0] : memref<128x512xf32, #tpu.memory_space<vmem>>, vector<128x512xf32>
    %cst = arith.constant 0.000000e+00 : f32
    %1 = vector.broadcast %cst : f32 to vector<128x512xf32>
    %2 = arith.maximumf %0, %1 : vector<128x512xf32>
    %3 = math.absf %0 : vector<128x512xf32>
    %cst_1 = arith.constant 0.000000e+00 : f32
    %4 = vector.broadcast %cst_1 : f32 to vector<128x512xf32>
    %5 = arith.subf %4, %3 : vector<128x512xf32>
    %6 = math.exp %5 : vector<128x512xf32>
    %7 = math.log1p %6 : vector<128x512xf32>
    %8 = arith.addf %2, %7 : vector<128x512xf32>
    %cst_2 = arith.constant 9.99999974E-5 : f32
    %cst_3 = arith.constant 1.000000e+04 : f32
    %9 = vector.broadcast %cst_2 : f32 to vector<128x512xf32>
    %10 = arith.maximumf %9, %8 : vector<128x512xf32>
    %11 = vector.broadcast %cst_3 : f32 to vector<128x512xf32>
    %12 = arith.minimumf %11, %10 : vector<128x512xf32>
    %c0_4 = arith.constant 0 : index
    %c0_5 = arith.constant 0 : index
    %13 = vector.load %arg2[%c0_4, %c0_5] : memref<128x512xf32, #tpu.memory_space<vmem>>, vector<128x512xf32>
    tpu.vector_store %arg2[%c0_4, %c0_5], %12 {strides = array<i32>} : memref<128x512xf32, #tpu.memory_space<vmem>>, vector<128x512xf32>,
    return
  }
  func.func @transform_0(%arg0: i32) -> (i32, i32) {
    %c0_i32 = arith.constant 0 : i32
    %c0_i32_0 = arith.constant 0 : i32
    return %arg0, %c0_i32 : i32, i32
  }
  func.func @transform_1(%arg0: i32) -> (i32, i32) {
    %c0_i32 = arith.constant 0 : i32
    %c0_i32_0 = arith.constant 0 : i32
    return %arg0, %c0_i32 : i32, i32
  }
}

</mosaic_0001>

<llo_original>
// kernel: tpu_custom_call.1
$region0: #{tpu_custom_call.1}
  #allocation0 [shape = 'u32[]', space=smem, size = 0x4, offset = 0x4, fixed_abs, tag = 'smem constant byte address 0x4 - core index']
  #allocation1 [shape = 'u32[72,128]{1,0:T(1,128)}', space=vmem, size = 0x9000, scoped, tag = 'internal scratch']
  %s0 = inlined_call_operand.hbm [shape: f32[256,512], index: 0, kind: input, shape index: {}]
  %s1 = inlined_call_operand.hbm [shape: f32[256,512], index: 1, kind: output, shape index: {}]
  %s2 = sld [smem:[#allocation0]]
  $region41: #{tpu_custom_call.1} parent=0
    _
  %s4 = ssub.s32 1, %s2
  %s5 = scalar_select 0, %s4, %s2
  $region1: #{tpu_custom_call.1} parent=0
    #allocation2 [shape = 'u8[524288]{0}', space=vmem, size = 0x80000, scoped, tag = 'input window, operand 0']
    #allocation3 [shape = 's32[2]{0}', space=sflag, size = 0x8, scoped, tag = 'scoped memory for tpu_custom_call.1']
    #allocation4 [shape = 's32[2]{0}', space=sflag, size = 0x8, scoped, tag = 'scoped memory for tpu_custom_call.1']
    #allocation5 [shape = 'u8[524288]{0}', space=vmem, size = 0x80000, scoped, tag = 'output window, operand 0']
    %6 = vsyncpa [#allocation3], 0
    %s7 = scalar_lea.sflag [#allocation3], 1
    %8 = vsyncpa %s7, 0
    %9 = vsyncpa [#allocation4], 0
    %s10 = scalar_lea.sflag [#allocation4], 1
    %11 = vsyncpa %s10, 0
    loop: start=0, step=1, limit=4
    $region2: #{tpu_custom_call.1} parent=1 // loop_pre_header
      _
    $region3: #{tpu_custom_call.1} parent=1 // loop_header
      %s13 = sphi 0, %s17
      %p14 = scmp.ge.s32.totalorder %s13, 4
      %s23 = sphi 0, %s25
      %s26 = sphi 0, %s23
      %s27 = sphi 0, %s26
      %s43 = sphi 0, %s27
      %s49 = sphi 0, %s51
      %s52 = sphi 0, %s49
      %s53 = sphi 0, %s52
      %s69 = sphi 0, %s53
    $region4: #{tpu_custom_call.1} parent=1 // loop_header_branch
      %16 = sbr.rel (%p14) target = $region8
    $region5: #{tpu_custom_call.1} parent=1 // loop_body
      %s18 = ssub.s32 %s13, 1
      %s19 = ssub.s32 %s13, 2
      %s20 = sadd.s32 %s13, 1
      %s21 = ssub.s32 %s13, %s20
      %p22 = scmp.eq.s32.totalorder %s21, 0
      %s24 = sadd.s32 %s23, 1
      %s25 = scalar_select %p22, %s23, %s24
      %p28 = pneg %p22
      %p29 = scmp.eq.s32.totalorder %s13, 1
      %p30 = por %p28, %p29
      %p31 = scmp.ne.s32.totalorder %s23, %s26
      %p32 = scmp.eq.s32.totalorder %s13, 0
      %p33 = por %p31, %p32
      %p34 = scmp.ne.s32.totalorder %s23, %s26
      %p35 = scmp.eq.s32.totalorder %s18, 1
      %p36 = por %p34, %p35
      %p37 = scmp.ne.s32.totalorder %s26, %s27
      %p38 = scmp.eq.s32.totalorder %s18, 0
      %p39 = por %p37, %p38
      %p40 = scmp.ne.s32.totalorder %s26, %s27
      %p41 = scmp.eq.s32.totalorder %s19, 1
      %p42 = por %p40, %p41
      %p44 = scmp.ne.s32.totalorder %s27, %s43
      %p45 = scmp.eq.s32.totalorder %s19, 0
      %p46 = por %p44, %p45
      %s47 = ssub.s32 %s13, %s20
      %p48 = scmp.eq.s32.totalorder %s47, 0
      %s50 = sadd.s32 %s49, 1
      %s51 = scalar_select %p48, %s49, %s50
      %p54 = pneg %p48
      %p55 = scmp.eq.s32.totalorder %s13, 1
      %p56 = por %p54, %p55
      %p57 = scmp.ne.s32.totalorder %s49, %s52
      %p58 = scmp.eq.s32.totalorder %s13, 0
      %p59 = por %p57, %p58
      %p60 = scmp.ne.s32.totalorder %s49, %s52
      %p61 = scmp.eq.s32.totalorder %s18, 1
      %p62 = por %p60, %p61
      %p63 = scmp.ne.s32.totalorder %s52, %s53
      %p64 = scmp.eq.s32.totalorder %s18, 0
      %p65 = por %p63, %p64
      %p66 = scmp.ne.s32.totalorder %s52, %s53
      %p67 = scmp.eq.s32.totalorder %s19, 1
      %p68 = por %p66, %p67
      %p70 = scmp.ne.s32.totalorder %s53, %s69
      %p71 = scmp.eq.s32.totalorder %s19, 0
      %p72 = por %p70, %p71
      %p73 = scmp.le.s32.totalorder 1, %s13
      %p74 = scmp.lt.s32.totalorder %s13, 3
      %p75 = pnand %p73, %p74
      %p76 = pneg %p75
      // Predicated region
      $region9: #{tpu_custom_call.1} parent=5 // pred_check
        _
      $region10: #{tpu_custom_call.1} parent=5 // pred_check_branch
        %78 = sbr.rel (%p75) target = $region12
      $region11: #{tpu_custom_call.1} parent=5 // pred_region
        %s79 = ssub.s32 %s13, 1
      $region12: #{tpu_custom_call.1} parent=5 // pred_fallthru
        _
      %p80 = scmp.lt.s32.totalorder %s13, 2
      // Predicated region
      $region13: #{tpu_custom_call.1} parent=5 // pred_check
        %p81 = pneg %p80
      $region14: #{tpu_custom_call.1} parent=5 // pred_check_branch
        %83 = sbr.rel (%p81) target = $region16
      $region15: #{tpu_custom_call.1} parent=5 // pred_region
        // Predicated region
        $region17: #{tpu_custom_call.1} parent=15 // pred_check
          %p84 = pneg %p33
        $region18: #{tpu_custom_call.1} parent=15 // pred_check_branch
          %86 = sbr.rel (%p84) target = $region20
        $region19: #{tpu_custom_call.1} parent=15 // pred_region
          %s87 = sand.u32 %s23, 1
          %s88 = scalar_lea.sflag [#allocation3], %s87
          %s89 = sand.u32 %s23, 1
          %s90 = smul.addr %s89, 512
          %s91 = scalar_lea.vmem [#allocation2], %s90
          %s92 = smul.u32 16, %s13
          %94 = vsyncadd %s88, 0
          %s95 = smul.addr %s92, 4
          %s96 = smul.addr %s95, 8
          %s97 = scalar_lea.hbm %s0, %s96
          %s98 = sshll.u32 %s97, 4
          %s99 = int_to_ptr.hbm [resolvable:$true] %s98
          %s100 = sshll.u32 %s91, 4
          %s101 = int_to_ptr.vmem [resolvable:$true] %s100
          %106 = dma.hbm_to_vmem [thread:$0]  %s99, 8192, %s101, %s88, 512, 512, 32
        $region20: #{tpu_custom_call.1} parent=15 // pred_fallthru
          _
      $region16: #{tpu_custom_call.1} parent=5 // pred_fallthru
        _
      %p107 = scmp.le.s32.totalorder 1, %s13
      %p108 = scmp.lt.s32.totalorder %s13, 3
      %p109 = pnand %p107, %p108
      %p110 = pneg %p109
      // Predicated region
      $region21: #{tpu_custom_call.1} parent=5 // pred_check
        _
      $region22: #{tpu_custom_call.1} parent=5 // pred_check_branch
        %112 = sbr.rel (%p109) target = $region24
      $region23: #{tpu_custom_call.1} parent=5 // pred_region
        %s113 = ssub.s32 %s13, 1
        %s114 = sand.u32 %s26, 1
        %s115 = scalar_lea.sflag [#allocation3], %s114
        %s116 = sand.u32 %s26, 1
        %s117 = smul.addr %s116, 512
        %s118 = scalar_lea.vmem [#allocation2], %s117
        // Predicated region
        $region25: #{tpu_custom_call.1} parent=23 // pred_check
          %p119 = pneg %p39
        $region26: #{tpu_custom_call.1} parent=23 // pred_check_branch
          %121 = sbr.rel (%p119) target = $region28
        $region27: #{tpu_custom_call.1} parent=23 // pred_region
          %123 = dma.done %s115, 8192
        $region28: #{tpu_custom_call.1} parent=23 // pred_fallthru
          _
        %s124 = sand.u32 %s26, 1
        %s125 = scalar_lea.sflag [#allocation3], %s124
        %s126 = sand.u32 %s26, 1
        %s127 = smul.addr %s126, 512
        %s128 = scalar_lea.vmem [#allocation2], %s127
        %p129 = pneg %p39
        %p130 = pneg %p36
        %p131 = pneg %p65
        %p132 = pneg %p62
        %s133 = sand.u32 %s52, 1
        %s134 = scalar_lea.sflag [#allocation4], %s133
        %s135 = sand.u32 %s52, 1
        %s136 = smul.addr %s135, 512
        %s137 = scalar_lea.vmem [#allocation5], %s136
        %s138 = smul.u32 16, %s18
        %s139 = smul.u32 16, %s18
        %v140 = vld [vmem:[%s118] sm:$0xff]
        %v141 = vld [vmem:[%s118 + $0x8] sm:$0xff]
        %v142 = vld [vmem:[%s118 + $0x10] sm:$0xff]
        %v143 = vld [vmem:[%s118 + $0x18] sm:$0xff]
        %v144 = vld [vmem:[%s118 + $0x20] sm:$0xff]
        %v145 = vld [vmem:[%s118 + $0x28] sm:$0xff]
        %v146 = vld [vmem:[%s118 + $0x30] sm:$0xff]
        %v147 = vld [vmem:[%s118 + $0x38] sm:$0xff]
        %v148 = vld [vmem:[%s118 + $0x40] sm:$0xff]
        %v149 = vld [vmem:[%s118 + $0x48] sm:$0xff]
        %v150 = vld [vmem:[%s118 + $0x50] sm:$0xff]
        %v151 = vld [vmem:[%s118 + $0x58] sm:$0xff]
        %v152 = vld [vmem:[%s118 + $0x60] sm:$0xff]
        %v153 = vld [vmem:[%s118 + $0x68] sm:$0xff]
        %v154 = vld [vmem:[%s118 + $0x70] sm:$0xff]
        %v155 = vld [vmem:[%s118 + $0x78] sm:$0xff]
        %v156 = vld [vmem:[%s118 + $0x80] sm:$0xff]
        %v157 = vld [vmem:[%s118 + $0x88] sm:$0xff]
        %v158 = vld [vmem:[%s118 + $0x90] sm:$0xff]
        %v159 = vld [vmem:[%s118 + $0x98] sm:$0xff]
        %v160 = vld [vmem:[%s118 + $0xa0] sm:$0xff]
        %v161 = vld [vmem:[%s118 + $0xa8] sm:$0xff]
        %v162 = vld [vmem:[%s118 + $0xb0] sm:$0xff]
        %v163 = vld [vmem:[%s118 + $0xb8] sm:$0xff]
        %v164 = vld [vmem:[%s118 + $0xc0] sm:$0xff]
        %v165 = vld [vmem:[%s118 + $0xc8] sm:$0xff]
        %v166 = vld [vmem:[%s118 + $0xd0] sm:$0xff]
        %v167 = vld [vmem:[%s118 + $0xd8] sm:$0xff]
        %v168 = vld [vmem:[%s118 + $0xe0] sm:$0xff]
        %v169 = vld [vmem:[%s118 + $0xe8] sm:$0xff]
        %v170 = vld [vmem:[%s118 + $0xf0] sm:$0xff]
        %v171 = vld [vmem:[%s118 + $0xf8] sm:$0xff]
        %v172 = vld [vmem:[%s118 + $0x100] sm:$0xff]
        %v173 = vld [vmem:[%s118 + $0x108] sm:$0xff]
        %v174 = vld [vmem:[%s118 + $0x110] sm:$0xff]
        %v175 = vld [vmem:[%s118 + $0x118] sm:$0xff]
        %v176 = vld [vmem:[%s118 + $0x120] sm:$0xff]
        %v177 = vld [vmem:[%s118 + $0x128] sm:$0xff]
        %v178 = vld [vmem:[%s118 + $0x130] sm:$0xff]
        %v179 = vld [vmem:[%s118 + $0x138] sm:$0xff]
        %v180 = vld [vmem:[%s118 + $0x140] sm:$0xff]
        %v181 = vld [vmem:[%s118 + $0x148] sm:$0xff]
        %v182 = vld [vmem:[%s118 + $0x150] sm:$0xff]
        %v183 = vld [vmem:[%s118 + $0x158] sm:$0xff]
        %v184 = vld [vmem:[%s118 + $0x160] sm:$0xff]
        %v185 = vld [vmem:[%s118 + $0x168] sm:$0xff]
        %v186 = vld [vmem:[%s118 + $0x170] sm:$0xff]
        %v187 = vld [vmem:[%s118 + $0x178] sm:$0xff]
        %v188 = vld [vmem:[%s118 + $0x180] sm:$0xff]
        %v189 = vld [vmem:[%s118 + $0x188] sm:$0xff]
        %v190 = vld [vmem:[%s118 + $0x190] sm:$0xff]
        %v191 = vld [vmem:[%s118 + $0x198] sm:$0xff]
        %v192 = vld [vmem:[%s118 + $0x1a0] sm:$0xff]
        %v193 = vld [vmem:[%s118 + $0x1a8] sm:$0xff]
        %v194 = vld [vmem:[%s118 + $0x1b0] sm:$0xff]
        %v195 = vld [vmem:[%s118 + $0x1b8] sm:$0xff]
        %v196 = vld [vmem:[%s118 + $0x1c0] sm:$0xff]
        %v197 = vld [vmem:[%s118 + $0x1c8] sm:$0xff]
        %v198 = vld [vmem:[%s118 + $0x1d0] sm:$0xff]
        %v199 = vld [vmem:[%s118 + $0x1d8] sm:$0xff]
        %v200 = vld [vmem:[%s118 + $0x1e0] sm:$0xff]
        %v201 = vld [vmem:[%s118 + $0x1e8] sm:$0xff]
        %v202 = vld [vmem:[%s118 + $0x1f0] sm:$0xff]
        %v203 = vld [vmem:[%s118 + $0x1f8] sm:$0xff]
        %v204 = vmax.f32 %v140, 0.0
        %v205 = vmax.f32 %v141, 0.0
        %v206 = vmax.f32 %v142, 0.0
        %v207 = vmax.f32 %v143, 0.0
        %v208 = vmax.f32 %v144, 0.0
        %v209 = vmax.f32 %v145, 0.0
        %v210 = vmax.f32 %v146, 0.0
        %v211 = vmax.f32 %v147, 0.0
        %v212 = vmax.f32 %v148, 0.0
        %v213 = vmax.f32 %v149, 0.0
        %v214 = vmax.f32 %v150, 0.0
        %v215 = vmax.f32 %v151, 0.0
        %v216 = vmax.f32 %v152, 0.0
        %v217 = vmax.f32 %v153, 0.0
        %v218 = vmax.f32 %v154, 0.0
        %v219 = vmax.f32 %v155, 0.0
        %v220 = vmax.f32 %v156, 0.0
        %v221 = vmax.f32 %v157, 0.0
        %v222 = vmax.f32 %v158, 0.0
        %v223 = vmax.f32 %v159, 0.0
        %v224 = vmax.f32 %v160, 0.0
        %v225 = vmax.f32 %v161, 0.0
        %v226 = vmax.f32 %v162, 0.0
        %v227 = vmax.f32 %v163, 0.0
        %v228 = vmax.f32 %v164, 0.0
        %v229 = vmax.f32 %v165, 0.0
        %v230 = vmax.f32 %v166, 0.0
        %v231 = vmax.f32 %v167, 0.0
        %v232 = vmax.f32 %v168, 0.0
        %v233 = vmax.f32 %v169, 0.0
        %v234 = vmax.f32 %v170, 0.0
        %v235 = vmax.f32 %v171, 0.0
        %v236 = vmax.f32 %v172, 0.0
        %v237 = vmax.f32 %v173, 0.0
        %v238 = vmax.f32 %v174, 0.0
        %v239 = vmax.f32 %v175, 0.0
        %v240 = vmax.f32 %v176, 0.0
        %v241 = vmax.f32 %v177, 0.0
        %v242 = vmax.f32 %v178, 0.0
        %v243 = vmax.f32 %v179, 0.0
        %v244 = vmax.f32 %v180, 0.0
        %v245 = vmax.f32 %v181, 0.0
        %v246 = vmax.f32 %v182, 0.0
        %v247 = vmax.f32 %v183, 0.0
        %v248 = vmax.f32 %v184, 0.0
        %v249 = vmax.f32 %v185, 0.0
        %v250 = vmax.f32 %v186, 0.0
        %v251 = vmax.f32 %v187, 0.0
        %v252 = vmax.f32 %v188, 0.0
        %v253 = vmax.f32 %v189, 0.0
        %v254 = vmax.f32 %v190, 0.0
        %v255 = vmax.f32 %v191, 0.0
        %v256 = vmax.f32 %v192, 0.0
        %v257 = vmax.f32 %v193, 0.0
        %v258 = vmax.f32 %v194, 0.0
        %v259 = vmax.f32 %v195, 0.0
        %v260 = vmax.f32 %v196, 0.0
        %v261 = vmax.f32 %v197, 0.0
        %v262 = vmax.f32 %v198, 0.0
        %v263 = vmax.f32 %v199, 0.0
        %v264 = vmax.f32 %v200, 0.0
        %v265 = vmax.f32 %v201, 0.0
        %v266 = vmax.f32 %v202, 0.0
        %v267 = vmax.f32 %v203, 0.0
        %v268 = vand.u32 2147483647, %v140
        %v269 = vand.u32 2147483647, %v141
        %v270 = vand.u32 2147483647, %v142
        %v271 = vand.u32 2147483647, %v143
        %v272 = vand.u32 2147483647, %v144
        %v273 = vand.u32 2147483647, %v145
        %v274 = vand.u32 2147483647, %v146
        %v275 = vand.u32 2147483647, %v147
        %v276 = vand.u32 2147483647, %v148
        %v277 = vand.u32 2147483647, %v149
        %v278 = vand.u32 2147483647, %v150
        %v279 = vand.u32 2147483647, %v151
        %v280 = vand.u32 2147483647, %v152
        %v281 = vand.u32 2147483647, %v153
        %v282 = vand.u32 2147483647, %v154
        %v283 = vand.u32 2147483647, %v155
        %v284 = vand.u32 2147483647, %v156
        %v285 = vand.u32 2147483647, %v157
        %v286 = vand.u32 2147483647, %v158
        %v287 = vand.u32 2147483647, %v159
        %v288 = vand.u32 2147483647, %v160
        %v289 = vand.u32 2147483647, %v161
        %v290 = vand.u32 2147483647, %v162
        %v291 = vand.u32 2147483647, %v163
        %v292 = vand.u32 2147483647, %v164
        %v293 = vand.u32 2147483647, %v165
        %v294 = vand.u32 2147483647, %v166
        %v295 = vand.u32 2147483647, %v167
        %v296 = vand.u32 2147483647, %v168
        %v297 = vand.u32 2147483647, %v169
        %v298 = vand.u32 2147483647, %v170
        %v299 = vand.u32 2147483647, %v171
        %v300 = vand.u32 2147483647, %v172
        %v301 = vand.u32 2147483647, %v173
        %v302 = vand.u32 2147483647, %v174
        %v303 = vand.u32 2147483647, %v175
        %v304 = vand.u32 2147483647, %v176
        %v305 = vand.u32 2147483647, %v177
        %v306 = vand.u32 2147483647, %v178
        %v307 = vand.u32 2147483647, %v179
        %v308 = vand.u32 2147483647, %v180
        %v309 = vand.u32 2147483647, %v181
        %v310 = vand.u32 2147483647, %v182
        %v311 = vand.u32 2147483647, %v183
        %v312 = vand.u32 2147483647, %v184
        %v313 = vand.u32 2147483647, %v185
        %v314 = vand.u32 2147483647, %v186
        %v315 = vand.u32 2147483647, %v187
        %v316 = vand.u32 2147483647, %v188
        %v317 = vand.u32 2147483647, %v189
        %v318 = vand.u32 2147483647, %v190
        %v319 = vand.u32 2147483647, %v191
        %v320 = vand.u32 2147483647, %v192
        %v321 = vand.u32 2147483647, %v193
        %v322 = vand.u32 2147483647, %v194
        %v323 = vand.u32 2147483647, %v195
        %v324 = vand.u32 2147483647, %v196
        %v325 = vand.u32 2147483647, %v197
        %v326 = vand.u32 2147483647, %v198
        %v327 = vand.u32 2147483647, %v199
        %v328 = vand.u32 2147483647, %v200
        %v329 = vand.u32 2147483647, %v201
        %v330 = vand.u32 2147483647, %v202
        %v331 = vand.u32 2147483647, %v203
        %v332 = vsub.f32 0.0, %v268
        %v333 = vsub.f32 0.0, %v269
        %v334 = vsub.f32 0.0, %v270
        %v335 = vsub.f32 0.0, %v271
        %v336 = vsub.f32 0.0, %v272
        %v337 = vsub.f32 0.0, %v273
        %v338 = vsub.f32 0.0, %v274
        %v339 = vsub.f32 0.0, %v275
        %v340 = vsub.f32 0.0, %v276
        %v341 = vsub.f32 0.0, %v277
        %v342 = vsub.f32 0.0, %v278
        %v343 = vsub.f32 0.0, %v279
        %v344 = vsub.f32 0.0, %v280
        %v345 = vsub.f32 0.0, %v281
        %v346 = vsub.f32 0.0, %v282
        %v347 = vsub.f32 0.0, %v283
        %v348 = vsub.f32 0.0, %v284
        %v349 = vsub.f32 0.0, %v285
        %v350 = vsub.f32 0.0, %v286
        %v351 = vsub.f32 0.0, %v287
        %v352 = vsub.f32 0.0, %v288
        %v353 = vsub.f32 0.0, %v289
        %v354 = vsub.f32 0.0, %v290
        %v355 = vsub.f32 0.0, %v291
        %v356 = vsub.f32 0.0, %v292
        %v357 = vsub.f32 0.0, %v293
        %v358 = vsub.f32 0.0, %v294
        %v359 = vsub.f32 0.0, %v295
        %v360 = vsub.f32 0.0, %v296
        %v361 = vsub.f32 0.0, %v297
        %v362 = vsub.f32 0.0, %v298
        %v363 = vsub.f32 0.0, %v299
        %v364 = vsub.f32 0.0, %v300
        %v365 = vsub.f32 0.0, %v301
        %v366 = vsub.f32 0.0, %v302
        %v367 = vsub.f32 0.0, %v303
        %v368 = vsub.f32 0.0, %v304
        %v369 = vsub.f32 0.0, %v305
        %v370 = vsub.f32 0.0, %v306
        %v371 = vsub.f32 0.0, %v307
        %v372 = vsub.f32 0.0, %v308
        %v373 = vsub.f32 0.0, %v309
        %v374 = vsub.f32 0.0, %v310
        %v375 = vsub.f32 0.0, %v311
        %v376 = vsub.f32 0.0, %v312
        %v377 = vsub.f32 0.0, %v313
        %v378 = vsub.f32 0.0, %v314
        %v379 = vsub.f32 0.0, %v315
        %v380 = vsub.f32 0.0, %v316
        %v381 = vsub.f32 0.0, %v317
        %v382 = vsub.f32 0.0, %v318
        %v383 = vsub.f32 0.0, %v319
        %v384 = vsub.f32 0.0, %v320
        %v385 = vsub.f32 0.0, %v321
        %v386 = vsub.f32 0.0, %v322
        %v387 = vsub.f32 0.0, %v323
        %v388 = vsub.f32 0.0, %v324
        %v389 = vsub.f32 0.0, %v325
        %v390 = vsub.f32 0.0, %v326
        %v391 = vsub.f32 0.0, %v327
        %v392 = vsub.f32 0.0, %v328
        %v393 = vsub.f32 0.0, %v329
        %v394 = vsub.f32 0.0, %v330
        %v395 = vsub.f32 0.0, %v331
        %v396 = vmul.f32 %v332, 1.442695
        %v397 = vpow.pop %v396
        %v398 = vmul.f32 %v333, 1.442695
        %v399 = vpow.pop %v398
        %v400 = vmul.f32 %v334, 1.442695
        %v401 = vpow.pop %v400
        %v402 = vmul.f32 %v335, 1.442695
        %v403 = vpow.pop %v402
        %v404 = vmul.f32 %v336, 1.442695
        %v405 = vpow.pop %v404
        %v406 = vmul.f32 %v337, 1.442695
        %v407 = vpow.pop %v406
        %v408 = vmul.f32 %v338, 1.442695
        %v409 = vpow.pop %v408
        %v410 = vmul.f32 %v339, 1.442695
        %v411 = vpow.pop %v410
        %v412 = vmul.f32 %v340, 1.442695
        %v413 = vpow.pop %v412
        %v414 = vmul.f32 %v341, 1.442695
        %v415 = vpow.pop %v414
        %v416 = vmul.f32 %v342, 1.442695
        %v417 = vpow.pop %v416
        %v418 = vmul.f32 %v343, 1.442695
        %v419 = vpow.pop %v418
        %v420 = vmul.f32 %v344, 1.442695
        %v421 = vpow.pop %v420
        %v422 = vmul.f32 %v345, 1.442695
        %v423 = vpow.pop %v422
        %v424 = vmul.f32 %v346, 1.442695
        %v425 = vpow.pop %v424
        %v426 = vmul.f32 %v347, 1.442695
        %v427 = vpow.pop %v426
        %v428 = vmul.f32 %v348, 1.442695
        %v429 = vpow.pop %v428
        %v430 = vmul.f32 %v349, 1.442695
        %v431 = vpow.pop %v430
        %v432 = vmul.f32 %v350, 1.442695
        %v433 = vpow.pop %v432
        %v434 = vmul.f32 %v351, 1.442695
        %v435 = vpow.pop %v434
        %v436 = vmul.f32 %v352, 1.442695
        %v437 = vpow.pop %v436
        %v438 = vmul.f32 %v353, 1.442695
        %v439 = vpow.pop %v438
        %v440 = vmul.f32 %v354, 1.442695
        %v441 = vpow.pop %v440
        %v442 = vmul.f32 %v355, 1.442695
        %v443 = vpow.pop %v442
        %v444 = vmul.f32 %v356, 1.442695
        %v445 = vpow.pop %v444
        %v446 = vmul.f32 %v357, 1.442695
        %v447 = vpow.pop %v446
        %v448 = vmul.f32 %v358, 1.442695
        %v449 = vpow.pop %v448
        %v450 = vmul.f32 %v359, 1.442695
        %v451 = vpow.pop %v450
        %v452 = vmul.f32 %v360, 1.442695
        %v453 = vpow.pop %v452
        %v454 = vmul.f32 %v361, 1.442695
        %v455 = vpow.pop %v454
        %v456 = vmul.f32 %v362, 1.442695
        %v457 = vpow.pop %v456
        %v458 = vmul.f32 %v363, 1.442695
        %v459 = vpow.pop %v458
        %v460 = vmul.f32 %v364, 1.442695
        %v461 = vpow.pop %v460
        %v462 = vmul.f32 %v365, 1.442695
        %v463 = vpow.pop %v462
        %v464 = vmul.f32 %v366, 1.442695
        %v465 = vpow.pop %v464
        %v466 = vmul.f32 %v367, 1.442695
        %v467 = vpow.pop %v466
        %v468 = vmul.f32 %v368, 1.442695
        %v469 = vpow.pop %v468
        %v470 = vmul.f32 %v369, 1.442695
        %v471 = vpow.pop %v470
        %v472 = vmul.f32 %v370, 1.442695
        %v473 = vpow.pop %v472
        %v474 = vmul.f32 %v371, 1.442695
        %v475 = vpow.pop %v474
        %v476 = vmul.f32 %v372, 1.442695
        %v477 = vpow.pop %v476
        %v478 = vmul.f32 %v373, 1.442695
        %v479 = vpow.pop %v478
        %v480 = vmul.f32 %v374, 1.442695
        %v481 = vpow.pop %v480
        %v482 = vmul.f32 %v375, 1.442695
        %v483 = vpow.pop %v482
        %v484 = vmul.f32 %v376, 1.442695
        %v485 = vpow.pop %v484
        %v486 = vmul.f32 %v377, 1.442695
        %v487 = vpow.pop %v486
        %v488 = vmul.f32 %v378, 1.442695
        %v489 = vpow.pop %v488
        %v490 = vmul.f32 %v379, 1.442695
        %v491 = vpow.pop %v490
        %v492 = vmul.f32 %v380, 1.442695
        %v493 = vpow.pop %v492
        %v494 = vmul.f32 %v381, 1.442695
        %v495 = vpow.pop %v494
        %v496 = vmul.f32 %v382, 1.442695
        %v497 = vpow.pop %v496
        %v498 = vmul.f32 %v383, 1.442695
        %v499 = vpow.pop %v498
        %v500 = vmul.f32 %v384, 1.442695
        %v501 = vpow.pop %v500
        %v502 = vmul.f32 %v385, 1.442695
        %v503 = vpow.pop %v502
        %v504 = vmul.f32 %v386, 1.442695
        %v505 = vpow.pop %v504
        %v506 = vmul.f32 %v387, 1.442695
        %v507 = vpow.pop %v506
        %v508 = vmul.f32 %v388, 1.442695
        %v509 = vpow.pop %v508
        %v510 = vmul.f32 %v389, 1.442695
        %v511 = vpow.pop %v510
        %v512 = vmul.f32 %v390, 1.442695
        %v513 = vpow.pop %v512
        %v514 = vmul.f32 %v391, 1.442695
        %v515 = vpow.pop %v514
        %v516 = vmul.f32 %v392, 1.442695
        %v517 = vpow.pop %v516
        %v518 = vmul.f32 %v393, 1.442695
        %v519 = vpow.pop %v518
        %v520 = vmul.f32 %v394, 1.442695
        %v521 = vpow.pop %v520
        %v522 = vmul.f32 %v395, 1.442695
        %v523 = vpow.pop %v522
        %v524 = vadd.f32 %v397, 1.0
        %v525 = vlog2.pop %v524
        %v526 = vmul.f32 %v525, 0.6931472
        %v527 = vmul.f32 -0.5, %v397
        %v528 = vadd.f32 %v527, 1.0
        %v529 = vmul.f32 %v528, %v397
        %v530 = vand.u32 2147483647, %v397
        %vm531 = vcmp.lt.f32.partialorder %v530, 0.0004427343
        %v532 = vsel %vm531, %v529, %v526
        %v533 = vadd.f32 %v399, 1.0
        %v534 = vlog2.pop %v533
        %v535 = vmul.f32 %v534, 0.6931472
        %v536 = vmul.f32 -0.5, %v399
        %v537 = vadd.f32 %v536, 1.0
        %v538 = vmul.f32 %v537, %v399
        %v539 = vand.u32 2147483647, %v399
        %vm540 = vcmp.lt.f32.partialorder %v539, 0.0004427343
        %v541 = vsel %vm540, %v538, %v535
        %v542 = vadd.f32 %v401, 1.0
        %v543 = vlog2.pop %v542
        %v544 = vmul.f32 %v543, 0.6931472
        %v545 = vmul.f32 -0.5, %v401
        %v546 = vadd.f32 %v545, 1.0
        %v547 = vmul.f32 %v546, %v401
        %v548 = vand.u32 2147483647, %v401
        %vm549 = vcmp.lt.f32.partialorder %v548, 0.0004427343
        %v550 = vsel %vm549, %v547, %v544
        %v551 = vadd.f32 %v403, 1.0
        %v552 = vlog2.pop %v551
        %v553 = vmul.f32 %v552, 0.6931472
        %v554 = vmul.f32 -0.5, %v403
        %v555 = vadd.f32 %v554, 1.0
        %v556 = vmul.f32 %v555, %v403
        %v557 = vand.u32 2147483647, %v403
        %vm558 = vcmp.lt.f32.partialorder %v557, 0.0004427343
        %v559 = vsel %vm558, %v556, %v553
        %v560 = vadd.f32 %v405, 1.0
        %v561 = vlog2.pop %v560
        %v562 = vmul.f32 %v561, 0.6931472
        %v563 = vmul.f32 -0.5, %v405
        %v564 = vadd.f32 %v563, 1.0
        %v565 = vmul.f32 %v564, %v405
        %v566 = vand.u32 2147483647, %v405
        %vm567 = vcmp.lt.f32.partialorder %v566, 0.0004427343
        %v568 = vsel %vm567, %v565, %v562
        %v569 = vadd.f32 %v407, 1.0
        %v570 = vlog2.pop %v569
        %v571 = vmul.f32 %v570, 0.6931472
        %v572 = vmul.f32 -0.5, %v407
        %v573 = vadd.f32 %v572, 1.0
        %v574 = vmul.f32 %v573, %v407
        %v575 = vand.u32 2147483647, %v407
        %vm576 = vcmp.lt.f32.partialorder %v575, 0.0004427343
        %v577 = vsel %vm576, %v574, %v571
        %v578 = vadd.f32 %v409, 1.0
        %v579 = vlog2.pop %v578
        %v580 = vmul.f32 %v579, 0.6931472
        %v581 = vmul.f32 -0.5, %v409
        %v582 = vadd.f32 %v581, 1.0
        %v583 = vmul.f32 %v582, %v409
        %v584 = vand.u32 2147483647, %v409
        %vm585 = vcmp.lt.f32.partialorder %v584, 0.0004427343
        %v586 = vsel %vm585, %v583, %v580
        %v587 = vadd.f32 %v411, 1.0
        %v588 = vlog2.pop %v587
        %v589 = vmul.f32 %v588, 0.6931472
        %v590 = vmul.f32 -0.5, %v411
        %v591 = vadd.f32 %v590, 1.0
        %v592 = vmul.f32 %v591, %v411
        %v593 = vand.u32 2147483647, %v411
        %vm594 = vcmp.lt.f32.partialorder %v593, 0.0004427343
        %v595 = vsel %vm594, %v592, %v589
        %v596 = vadd.f32 %v413, 1.0
        %v597 = vlog2.pop %v596
        %v598 = vmul.f32 %v597, 0.6931472
        %v599 = vmul.f32 -0.5, %v413
        %v600 = vadd.f32 %v599, 1.0
        %v601 = vmul.f32 %v600, %v413
        %v602 = vand.u32 2147483647, %v413
        %vm603 = vcmp.lt.f32.partialorder %v602, 0.0004427343
        %v604 = vsel %vm603, %v601, %v598
        %v605 = vadd.f32 %v415, 1.0
        %v606 = vlog2.pop %v605
        %v607 = vmul.f32 %v606, 0.6931472
        %v608 = vmul.f32 -0.5, %v415
        %v609 = vadd.f32 %v608, 1.0
        %v610 = vmul.f32 %v609, %v415
        %v611 = vand.u32 2147483647, %v415
        %vm612 = vcmp.lt.f32.partialorder %v611, 0.0004427343
        %v613 = vsel %vm612, %v610, %v607
        %v614 = vadd.f32 %v417, 1.0
        %v615 = vlog2.pop %v614
        %v616 = vmul.f32 %v615, 0.6931472
        %v617 = vmul.f32 -0.5, %v417
        %v618 = vadd.f32 %v617, 1.0
        %v619 = vmul.f32 %v618, %v417
        %v620 = vand.u32 2147483647, %v417
        %vm621 = vcmp.lt.f32.partialorder %v620, 0.0004427343
        %v622 = vsel %vm621, %v619, %v616
        %v623 = vadd.f32 %v419, 1.0
        %v624 = vlog2.pop %v623
        %v625 = vmul.f32 %v624, 0.6931472
        %v626 = vmul.f32 -0.5, %v419
        %v627 = vadd.f32 %v626, 1.0
        %v628 = vmul.f32 %v627, %v419
        %v629 = vand.u32 2147483647, %v419
        %vm630 = vcmp.lt.f32.partialorder %v629, 0.0004427343
        %v631 = vsel %vm630, %v628, %v625
        %v632 = vadd.f32 %v421, 1.0
        %v633 = vlog2.pop %v632
        %v634 = vmul.f32 %v633, 0.6931472
        %v635 = vmul.f32 -0.5, %v421
        %v636 = vadd.f32 %v635, 1.0
        %v637 = vmul.f32 %v636, %v421
        %v638 = vand.u32 2147483647, %v421
        %vm639 = vcmp.lt.f32.partialorder %v638, 0.0004427343
        %v640 = vsel %vm639, %v637, %v634
        %v641 = vadd.f32 %v423, 1.0
        %v642 = vlog2.pop %v641
        %v643 = vmul.f32 %v642, 0.6931472
        %v644 = vmul.f32 -0.5, %v423
        %v645 = vadd.f32 %v644, 1.0
        %v646 = vmul.f32 %v645, %v423
        %v647 = vand.u32 2147483647, %v423
        %vm648 = vcmp.lt.f32.partialorder %v647, 0.0004427343
        %v649 = vsel %vm648, %v646, %v643
        %v650 = vadd.f32 %v425, 1.0
        %v651 = vlog2.pop %v650
        %v652 = vmul.f32 %v651, 0.6931472
        %v653 = vmul.f32 -0.5, %v425
        %v654 = vadd.f32 %v653, 1.0
        %v655 = vmul.f32 %v654, %v425
        %v656 = vand.u32 2147483647, %v425
        %vm657 = vcmp.lt.f32.partialorder %v656, 0.0004427343
        %v658 = vsel %vm657, %v655, %v652
        %v659 = vadd.f32 %v427, 1.0
        %v660 = vlog2.pop %v659
        %v661 = vmul.f32 %v660, 0.6931472
        %v662 = vmul.f32 -0.5, %v427
        %v663 = vadd.f32 %v662, 1.0
        %v664 = vmul.f32 %v663, %v427
        %v665 = vand.u32 2147483647, %v427
        %vm666 = vcmp.lt.f32.partialorder %v665, 0.0004427343
        %v667 = vsel %vm666, %v664, %v661
        %v668 = vadd.f32 %v429, 1.0
        %v669 = vlog2.pop %v668
        %v670 = vmul.f32 %v669, 0.6931472
        %v671 = vmul.f32 -0.5, %v429
        %v672 = vadd.f32 %v671, 1.0
        %v673 = vmul.f32 %v672, %v429
        %v674 = vand.u32 2147483647, %v429
        %vm675 = vcmp.lt.f32.partialorder %v674, 0.0004427343
        %v676 = vsel %vm675, %v673, %v670
        %v677 = vadd.f32 %v431, 1.0
        %v678 = vlog2.pop %v677
        %v679 = vmul.f32 %v678, 0.6931472
        %v680 = vmul.f32 -0.5, %v431
        %v681 = vadd.f32 %v680, 1.0
        %v682 = vmul.f32 %v681, %v431
        %v683 = vand.u32 2147483647, %v431
        %vm684 = vcmp.lt.f32.partialorder %v683, 0.0004427343
        %v685 = vsel %vm684, %v682, %v679
        %v686 = vadd.f32 %v433, 1.0
        %v687 = vlog2.pop %v686
        %v688 = vmul.f32 %v687, 0.6931472
        %v689 = vmul.f32 -0.5, %v433
        %v690 = vadd.f32 %v689, 1.0
        %v691 = vmul.f32 %v690, %v433
        %v692 = vand.u32 2147483647, %v433
        %vm693 = vcmp.lt.f32.partialorder %v692, 0.0004427343
        %v694 = vsel %vm693, %v691, %v688
        %v695 = vadd.f32 %v435, 1.0
        %v696 = vlog2.pop %v695
        %v697 = vmul.f32 %v696, 0.6931472
        %v698 = vmul.f32 -0.5, %v435
        %v699 = vadd.f32 %v698, 1.0
        %v700 = vmul.f32 %v699, %v435
        %v701 = vand.u32 2147483647, %v435
        %vm702 = vcmp.lt.f32.partialorder %v701, 0.0004427343
        %v703 = vsel %vm702, %v700, %v697
        %v704 = vadd.f32 %v437, 1.0
        %v705 = vlog2.pop %v704
        %v706 = vmul.f32 %v705, 0.6931472
        %v707 = vmul.f32 -0.5, %v437
        %v708 = vadd.f32 %v707, 1.0
        %v709 = vmul.f32 %v708, %v437
        %v710 = vand.u32 2147483647, %v437
        %vm711 = vcmp.lt.f32.partialorder %v710, 0.0004427343
        %v712 = vsel %vm711, %v709, %v706
        %v713 = vadd.f32 %v439, 1.0
        %v714 = vlog2.pop %v713
        %v715 = vmul.f32 %v714, 0.6931472
        %v716 = vmul.f32 -0.5, %v439
        %v717 = vadd.f32 %v716, 1.0
        %v718 = vmul.f32 %v717, %v439
        %v719 = vand.u32 2147483647, %v439
        %vm720 = vcmp.lt.f32.partialorder %v719, 0.0004427343
        %v721 = vsel %vm720, %v718, %v715
        %v722 = vadd.f32 %v441, 1.0
        %v723 = vlog2.pop %v722
        %v724 = vmul.f32 %v723, 0.6931472
        %v725 = vmul.f32 -0.5, %v441
        %v726 = vadd.f32 %v725, 1.0
        %v727 = vmul.f32 %v726, %v441
        %v728 = vand.u32 2147483647, %v441
        %vm729 = vcmp.lt.f32.partialorder %v728, 0.0004427343
        %v730 = vsel %vm729, %v727, %v724
        %v731 = vadd.f32 %v443, 1.0
        %v732 = vlog2.pop %v731
        %v733 = vmul.f32 %v732, 0.6931472
        %v734 = vmul.f32 -0.5, %v443
        %v735 = vadd.f32 %v734, 1.0
        %v736 = vmul.f32 %v735, %v443
        %v737 = vand.u32 2147483647, %v443
        %vm738 = vcmp.lt.f32.partialorder %v737, 0.0004427343
        %v739 = vsel %vm738, %v736, %v733
        %v740 = vadd.f32 %v445, 1.0
        %v741 = vlog2.pop %v740
        %v742 = vmul.f32 %v741, 0.6931472
        %v743 = vmul.f32 -0.5, %v445
        %v744 = vadd.f32 %v743, 1.0
        %v745 = vmul.f32 %v744, %v445
        %v746 = vand.u32 2147483647, %v445
        %vm747 = vcmp.lt.f32.partialorder %v746, 0.0004427343
        %v748 = vsel %vm747, %v745, %v742
        %v749 = vadd.f32 %v447, 1.0
        %v750 = vlog2.pop %v749
        %v751 = vmul.f32 %v750, 0.6931472
        %v752 = vmul.f32 -0.5, %v447
        %v753 = vadd.f32 %v752, 1.0
        %v754 = vmul.f32 %v753, %v447
        %v755 = vand.u32 2147483647, %v447
        %vm756 = vcmp.lt.f32.partialorder %v755, 0.0004427343
        %v757 = vsel %vm756, %v754, %v751
        %v758 = vadd.f32 %v449, 1.0
        %v759 = vlog2.pop %v758
        %v760 = vmul.f32 %v759, 0.6931472
        %v761 = vmul.f32 -0.5, %v449
        %v762 = vadd.f32 %v761, 1.0
        %v763 = vmul.f32 %v762, %v449
        %v764 = vand.u32 2147483647, %v449
        %vm765 = vcmp.lt.f32.partialorder %v764, 0.0004427343
        %v766 = vsel %vm765, %v763, %v760
        %v767 = vadd.f32 %v451, 1.0
        %v768 = vlog2.pop %v767
        %v769 = vmul.f32 %v768, 0.6931472
        %v770 = vmul.f32 -0.5, %v451
        %v771 = vadd.f32 %v770, 1.0
        %v772 = vmul.f32 %v771, %v451
        %v773 = vand.u32 2147483647, %v451
        %vm774 = vcmp.lt.f32.partialorder %v773, 0.0004427343
        %v775 = vsel %vm774, %v772, %v769
        %v776 = vadd.f32 %v453, 1.0
        %v777 = vlog2.pop %v776
        %v778 = vmul.f32 %v777, 0.6931472
        %v779 = vmul.f32 -0.5, %v453
        %v780 = vadd.f32 %v779, 1.0
        %v781 = vmul.f32 %v780, %v453
        %v782 = vand.u32 2147483647, %v453
        %vm783 = vcmp.lt.f32.partialorder %v782, 0.0004427343
        %v784 = vsel %vm783, %v781, %v778
        %v785 = vadd.f32 %v455, 1.0
        %v786 = vlog2.pop %v785
        %v787 = vmul.f32 %v786, 0.6931472
        %v788 = vmul.f32 -0.5, %v455
        %v789 = vadd.f32 %v788, 1.0
        %v790 = vmul.f32 %v789, %v455
        %v791 = vand.u32 2147483647, %v455
        %vm792 = vcmp.lt.f32.partialorder %v791, 0.0004427343
        %v793 = vsel %vm792, %v790, %v787
        %v794 = vadd.f32 %v457, 1.0
        %v795 = vlog2.pop %v794
        %v796 = vmul.f32 %v795, 0.6931472
        %v797 = vmul.f32 -0.5, %v457
        %v798 = vadd.f32 %v797, 1.0
        %v799 = vmul.f32 %v798, %v457
        %v800 = vand.u32 2147483647, %v457
        %vm801 = vcmp.lt.f32.partialorder %v800, 0.0004427343
        %v802 = vsel %vm801, %v799, %v796
        %v803 = vadd.f32 %v459, 1.0
        %v804 = vlog2.pop %v803
        %v805 = vmul.f32 %v804, 0.6931472
        %v806 = vmul.f32 -0.5, %v459
        %v807 = vadd.f32 %v806, 1.0
        %v808 = vmul.f32 %v807, %v459
        %v809 = vand.u32 2147483647, %v459
        %vm810 = vcmp.lt.f32.partialorder %v809, 0.0004427343
        %v811 = vsel %vm810, %v808, %v805
        %v812 = vadd.f32 %v461, 1.0
        %v813 = vlog2.pop %v812
        %v814 = vmul.f32 %v813, 0.6931472
        %v815 = vmul.f32 -0.5, %v461
        %v816 = vadd.f32 %v815, 1.0
        %v817 = vmul.f32 %v816, %v461
        %v818 = vand.u32 2147483647, %v461
        %vm819 = vcmp.lt.f32.partialorder %v818, 0.0004427343
        %v820 = vsel %vm819, %v817, %v814
        %v821 = vadd.f32 %v463, 1.0
        %v822 = vlog2.pop %v821
        %v823 = vmul.f32 %v822, 0.6931472
        %v824 = vmul.f32 -0.5, %v463
        %v825 = vadd.f32 %v824, 1.0
        %v826 = vmul.f32 %v825, %v463
        %v827 = vand.u32 2147483647, %v463
        %vm828 = vcmp.lt.f32.partialorder %v827, 0.0004427343
        %v829 = vsel %vm828, %v826, %v823
        %v830 = vadd.f32 %v465, 1.0
        %v831 = vlog2.pop %v830
        %v832 = vmul.f32 %v831, 0.6931472
        %v833 = vmul.f32 -0.5, %v465
        %v834 = vadd.f32 %v833, 1.0
        %v835 = vmul.f32 %v834, %v465
        %v836 = vand.u32 2147483647, %v465
        %vm837 = vcmp.lt.f32.partialorder %v836, 0.0004427343
        %v838 = vsel %vm837, %v835, %v832
        %v839 = vadd.f32 %v467, 1.0
        %v840 = vlog2.pop %v839
        %v841 = vmul.f32 %v840, 0.6931472
        %v842 = vmul.f32 -0.5, %v467
        %v843 = vadd.f32 %v842, 1.0
        %v844 = vmul.f32 %v843, %v467
        %v845 = vand.u32 2147483647, %v467
        %vm846 = vcmp.lt.f32.partialorder %v845, 0.0004427343
        %v847 = vsel %vm846, %v844, %v841
        %v848 = vadd.f32 %v469, 1.0
        %v849 = vlog2.pop %v848
        %v850 = vmul.f32 %v849, 0.6931472
        %v851 = vmul.f32 -0.5, %v469
        %v852 = vadd.f32 %v851, 1.0
        %v853 = vmul.f32 %v852, %v469
        %v854 = vand.u32 2147483647, %v469
        %vm855 = vcmp.lt.f32.partialorder %v854, 0.0004427343
        %v856 = vsel %vm855, %v853, %v850
        %v857 = vadd.f32 %v471, 1.0
        %v858 = vlog2.pop %v857
        %v859 = vmul.f32 %v858, 0.6931472
        %v860 = vmul.f32 -0.5, %v471
        %v861 = vadd.f32 %v860, 1.0
        %v862 = vmul.f32 %v861, %v471
        %v863 = vand.u32 2147483647, %v471
        %vm864 = vcmp.lt.f32.partialorder %v863, 0.0004427343
        %v865 = vsel %vm864, %v862, %v859
        %v866 = vadd.f32 %v473, 1.0
        %v867 = vlog2.pop %v866
        %v868 = vmul.f32 %v867, 0.6931472
        %v869 = vmul.f32 -0.5, %v473
        %v870 = vadd.f32 %v869, 1.0
        %v871 = vmul.f32 %v870, %v473
        %v872 = vand.u32 2147483647, %v473
        %vm873 = vcmp.lt.f32.partialorder %v872, 0.0004427343
        %v874 = vsel %vm873, %v871, %v868
        %v875 = vadd.f32 %v475, 1.0
        %v876 = vlog2.pop %v875
        %v877 = vmul.f32 %v876, 0.6931472
        %v878 = vmul.f32 -0.5, %v475
        %v879 = vadd.f32 %v878, 1.0
        %v880 = vmul.f32 %v879, %v475
        %v881 = vand.u32 2147483647, %v475
        %vm882 = vcmp.lt.f32.partialorder %v881, 0.0004427343
        %v883 = vsel %vm882, %v880, %v877
        %v884 = vadd.f32 %v477, 1.0
        %v885 = vlog2.pop %v884
        %v886 = vmul.f32 %v885, 0.6931472
        %v887 = vmul.f32 -0.5, %v477
        %v888 = vadd.f32 %v887, 1.0
        %v889 = vmul.f32 %v888, %v477
        %v890 = vand.u32 2147483647, %v477
        %vm891 = vcmp.lt.f32.partialorder %v890, 0.0004427343
        %v892 = vsel %vm891, %v889, %v886
        %v893 = vadd.f32 %v479, 1.0
        %v894 = vlog2.pop %v893
        %v895 = vmul.f32 %v894, 0.6931472
        %v896 = vmul.f32 -0.5, %v479
        %v897 = vadd.f32 %v896, 1.0
        %v898 = vmul.f32 %v897, %v479
        %v899 = vand.u32 2147483647, %v479
        %vm900 = vcmp.lt.f32.partialorder %v899, 0.0004427343
        %v901 = vsel %vm900, %v898, %v895
        %v902 = vadd.f32 %v481, 1.0
        %v903 = vlog2.pop %v902
        %v904 = vmul.f32 %v903, 0.6931472
        %v905 = vmul.f32 -0.5, %v481
        %v906 = vadd.f32 %v905, 1.0
        %v907 = vmul.f32 %v906, %v481
        %v908 = vand.u32 2147483647, %v481
        %vm909 = vcmp.lt.f32.partialorder %v908, 0.0004427343
        %v910 = vsel %vm909, %v907, %v904
        %v911 = vadd.f32 %v483, 1.0
        %v912 = vlog2.pop %v911
        %v913 = vmul.f32 %v912, 0.6931472
        %v914 = vmul.f32 -0.5, %v483
        %v915 = vadd.f32 %v914, 1.0
        %v916 = vmul.f32 %v915, %v483
        %v917 = vand.u32 2147483647, %v483
        %vm918 = vcmp.lt.f32.partialorder %v917, 0.0004427343
        %v919 = vsel %vm918, %v916, %v913
        %v920 = vadd.f32 %v485, 1.0
        %v921 = vlog2.pop %v920
        %v922 = vmul.f32 %v921, 0.6931472
        %v923 = vmul.f32 -0.5, %v485
        %v924 = vadd.f32 %v923, 1.0
        %v925 = vmul.f32 %v924, %v485
        %v926 = vand.u32 2147483647, %v485
        %vm927 = vcmp.lt.f32.partialorder %v926, 0.0004427343
        %v928 = vsel %vm927, %v925, %v922
        %v929 = vadd.f32 %v487, 1.0
        %v930 = vlog2.pop %v929
        %v931 = vmul.f32 %v930, 0.6931472
        %v932 = vmul.f32 -0.5, %v487
        %v933 = vadd.f32 %v932, 1.0
        %v934 = vmul.f32 %v933, %v487
        %v935 = vand.u32 2147483647, %v487
        %vm936 = vcmp.lt.f32.partialorder %v935, 0.0004427343
        %v937 = vsel %vm936, %v934, %v931
        %v938 = vadd.f32 %v489, 1.0
        %v939 = vlog2.pop %v938
        %v940 = vmul.f32 %v939, 0.6931472
        %v941 = vmul.f32 -0.5, %v489
        %v942 = vadd.f32 %v941, 1.0
        %v943 = vmul.f32 %v942, %v489
        %v944 = vand.u32 2147483647, %v489
        %vm945 = vcmp.lt.f32.partialorder %v944, 0.0004427343
        %v946 = vsel %vm945, %v943, %v940
        %v947 = vadd.f32 %v491, 1.0
        %v948 = vlog2.pop %v947
        %v949 = vmul.f32 %v948, 0.6931472
        %v950 = vmul.f32 -0.5, %v491
        %v951 = vadd.f32 %v950, 1.0
        %v952 = vmul.f32 %v951, %v491
        %v953 = vand.u32 2147483647, %v491
        %vm954 = vcmp.lt.f32.partialorder %v953, 0.0004427343
        %v955 = vsel %vm954, %v952, %v949
        %v956 = vadd.f32 %v493, 1.0
        %v957 = vlog2.pop %v956
        %v958 = vmul.f32 %v957, 0.6931472
        %v959 = vmul.f32 -0.5, %v493
        %v960 = vadd.f32 %v959, 1.0
        %v961 = vmul.f32 %v960, %v493
        %v962 = vand.u32 2147483647, %v493
        %vm963 = vcmp.lt.f32.partialorder %v962, 0.0004427343
        %v964 = vsel %vm963, %v961, %v958
        %v965 = vadd.f32 %v495, 1.0
        %v966 = vlog2.pop %v965
        %v967 = vmul.f32 %v966, 0.6931472
        %v968 = vmul.f32 -0.5, %v495
        %v969 = vadd.f32 %v968, 1.0
        %v970 = vmul.f32 %v969, %v495
        %v971 = vand.u32 2147483647, %v495
        %vm972 = vcmp.lt.f32.partialorder %v971, 0.0004427343
        %v973 = vsel %vm972, %v970, %v967
        %v974 = vadd.f32 %v497, 1.0
        %v975 = vlog2.pop %v974
        %v976 = vmul.f32 %v975, 0.6931472
        %v977 = vmul.f32 -0.5, %v497
        %v978 = vadd.f32 %v977, 1.0
        %v979 = vmul.f32 %v978, %v497
        %v980 = vand.u32 2147483647, %v497
        %vm981 = vcmp.lt.f32.partialorder %v980, 0.0004427343
        %v982 = vsel %vm981, %v979, %v976
        %v983 = vadd.f32 %v499, 1.0
        %v984 = vlog2.pop %v983
        %v985 = vmul.f32 %v984, 0.6931472
        %v986 = vmul.f32 -0.5, %v499
        %v987 = vadd.f32 %v986, 1.0
        %v988 = vmul.f32 %v987, %v499
        %v989 = vand.u32 2147483647, %v499
        %vm990 = vcmp.lt.f32.partialorder %v989, 0.0004427343
        %v991 = vsel %vm990, %v988, %v985
        %v992 = vadd.f32 %v501, 1.0
        %v993 = vlog2.pop %v992
        %v994 = vmul.f32 %v993, 0.6931472
        %v995 = vmul.f32 -0.5, %v501
        %v996 = vadd.f32 %v995, 1.0
        %v997 = vmul.f32 %v996, %v501
        %v998 = vand.u32 2147483647, %v501
        %vm999 = vcmp.lt.f32.partialorder %v998, 0.0004427343
        %v1000 = vsel %vm999, %v997, %v994
        %v1001 = vadd.f32 %v503, 1.0
        %v1002 = vlog2.pop %v1001
        %v1003 = vmul.f32 %v1002, 0.6931472
        %v1004 = vmul.f32 -0.5, %v503
        %v1005 = vadd.f32 %v1004, 1.0
        %v1006 = vmul.f32 %v1005, %v503
        %v1007 = vand.u32 2147483647, %v503
        %vm1008 = vcmp.lt.f32.partialorder %v1007, 0.0004427343
        %v1009 = vsel %vm1008, %v1006, %v1003
        %v1010 = vadd.f32 %v505, 1.0
        %v1011 = vlog2.pop %v1010
        %v1012 = vmul.f32 %v1011, 0.6931472
        %v1013 = vmul.f32 -0.5, %v505
        %v1014 = vadd.f32 %v1013, 1.0
        %v1015 = vmul.f32 %v1014, %v505
        %v1016 = vand.u32 2147483647, %v505
        %vm1017 = vcmp.lt.f32.partialorder %v1016, 0.0004427343
        %v1018 = vsel %vm1017, %v1015, %v1012
        %v1019 = vadd.f32 %v507, 1.0
        %v1020 = vlog2.pop %v1019
        %v1021 = vmul.f32 %v1020, 0.6931472
        %v1022 = vmul.f32 -0.5, %v507
        %v1023 = vadd.f32 %v1022, 1.0
        %v1024 = vmul.f32 %v1023, %v507
        %v1025 = vand.u32 2147483647, %v507
        %vm1026 = vcmp.lt.f32.partialorder %v1025, 0.0004427343
        %v1027 = vsel %vm1026, %v1024, %v1021
        %v1028 = vadd.f32 %v509, 1.0
        %v1029 = vlog2.pop %v1028
        %v1030 = vmul.f32 %v1029, 0.6931472
        %v1031 = vmul.f32 -0.5, %v509
        %v1032 = vadd.f32 %v1031, 1.0
        %v1033 = vmul.f32 %v1032, %v509
        %v1034 = vand.u32 2147483647, %v509
        %vm1035 = vcmp.lt.f32.partialorder %v1034, 0.0004427343
        %v1036 = vsel %vm1035, %v1033, %v1030
        %v1037 = vadd.f32 %v511, 1.0
        %v1038 = vlog2.pop %v1037
        %v1039 = vmul.f32 %v1038, 0.6931472
        %v1040 = vmul.f32 -0.5, %v511
        %v1041 = vadd.f32 %v1040, 1.0
        %v1042 = vmul.f32 %v1041, %v511
        %v1043 = vand.u32 2147483647, %v511
        %vm1044 = vcmp.lt.f32.partialorder %v1043, 0.0004427343
        %v1045 = vsel %vm1044, %v1042, %v1039
        %v1046 = vadd.f32 %v513, 1.0
        %v1047 = vlog2.pop %v1046
        %v1048 = vmul.f32 %v1047, 0.6931472
        %v1049 = vmul.f32 -0.5, %v513
        %v1050 = vadd.f32 %v1049, 1.0
        %v1051 = vmul.f32 %v1050, %v513
        %v1052 = vand.u32 2147483647, %v513
        %vm1053 = vcmp.lt.f32.partialorder %v1052, 0.0004427343
        %v1054 = vsel %vm1053, %v1051, %v1048
        %v1055 = vadd.f32 %v515, 1.0
        %v1056 = vlog2.pop %v1055
        %v1057 = vmul.f32 %v1056, 0.6931472
        %v1058 = vmul.f32 -0.5, %v515
        %v1059 = vadd.f32 %v1058, 1.0
        %v1060 = vmul.f32 %v1059, %v515
        %v1061 = vand.u32 2147483647, %v515
        %vm1062 = vcmp.lt.f32.partialorder %v1061, 0.0004427343
        %v1063 = vsel %vm1062, %v1060, %v1057
        %v1064 = vadd.f32 %v517, 1.0
        %v1065 = vlog2.pop %v1064
        %v1066 = vmul.f32 %v1065, 0.6931472
        %v1067 = vmul.f32 -0.5, %v517
        %v1068 = vadd.f32 %v1067, 1.0
        %v1069 = vmul.f32 %v1068, %v517
        %v1070 = vand.u32 2147483647, %v517
        %vm1071 = vcmp.lt.f32.partialorder %v1070, 0.0004427343
        %v1072 = vsel %vm1071, %v1069, %v1066
        %v1073 = vadd.f32 %v519, 1.0
        %v1074 = vlog2.pop %v1073
        %v1075 = vmul.f32 %v1074, 0.6931472
        %v1076 = vmul.f32 -0.5, %v519
        %v1077 = vadd.f32 %v1076, 1.0
        %v1078 = vmul.f32 %v1077, %v519
        %v1079 = vand.u32 2147483647, %v519
        %vm1080 = vcmp.lt.f32.partialorder %v1079, 0.0004427343
        %v1081 = vsel %vm1080, %v1078, %v1075
        %v1082 = vadd.f32 %v521, 1.0
        %v1083 = vlog2.pop %v1082
        %v1084 = vmul.f32 %v1083, 0.6931472
        %v1085 = vmul.f32 -0.5, %v521
        %v1086 = vadd.f32 %v1085, 1.0
        %v1087 = vmul.f32 %v1086, %v521
        %v1088 = vand.u32 2147483647, %v521
        %vm1089 = vcmp.lt.f32.partialorder %v1088, 0.0004427343
        %v1090 = vsel %vm1089, %v1087, %v1084
        %v1091 = vadd.f32 %v523, 1.0
        %v1092 = vlog2.pop %v1091
        %v1093 = vmul.f32 %v1092, 0.6931472
        %v1094 = vmul.f32 -0.5, %v523
        %v1095 = vadd.f32 %v1094, 1.0
        %v1096 = vmul.f32 %v1095, %v523
        %v1097 = vand.u32 2147483647, %v523
        %vm1098 = vcmp.lt.f32.partialorder %v1097, 0.0004427343
        %v1099 = vsel %vm1098, %v1096, %v1093
        %v1100 = vadd.f32 %v204, %v532
        %v1101 = vadd.f32 %v205, %v541
        %v1102 = vadd.f32 %v206, %v550
        %v1103 = vadd.f32 %v207, %v559
        %v1104 = vadd.f32 %v208, %v568
        %v1105 = vadd.f32 %v209, %v577
        %v1106 = vadd.f32 %v210, %v586
        %v1107 = vadd.f32 %v211, %v595
        %v1108 = vadd.f32 %v212, %v604
        %v1109 = vadd.f32 %v213, %v613
        %v1110 = vadd.f32 %v214, %v622
        %v1111 = vadd.f32 %v215, %v631
        %v1112 = vadd.f32 %v216, %v640
        %v1113 = vadd.f32 %v217, %v649
        %v1114 = vadd.f32 %v218, %v658
        %v1115 = vadd.f32 %v219, %v667
        %v1116 = vadd.f32 %v220, %v676
        %v1117 = vadd.f32 %v221, %v685
        %v1118 = vadd.f32 %v222, %v694
        %v1119 = vadd.f32 %v223, %v703
        %v1120 = vadd.f32 %v224, %v712
        %v1121 = vadd.f32 %v225, %v721
        %v1122 = vadd.f32 %v226, %v730
        %v1123 = vadd.f32 %v227, %v739
        %v1124 = vadd.f32 %v228, %v748
        %v1125 = vadd.f32 %v229, %v757
        %v1126 = vadd.f32 %v230, %v766
        %v1127 = vadd.f32 %v231, %v775
        %v1128 = vadd.f32 %v232, %v784
        %v1129 = vadd.f32 %v233, %v793
        %v1130 = vadd.f32 %v234, %v802
        %v1131 = vadd.f32 %v235, %v811
        %v1132 = vadd.f32 %v236, %v820
        %v1133 = vadd.f32 %v237, %v829
        %v1134 = vadd.f32 %v238, %v838
        %v1135 = vadd.f32 %v239, %v847
        %v1136 = vadd.f32 %v240, %v856
        %v1137 = vadd.f32 %v241, %v865
        %v1138 = vadd.f32 %v242, %v874
        %v1139 = vadd.f32 %v243, %v883
        %v1140 = vadd.f32 %v244, %v892
        %v1141 = vadd.f32 %v245, %v901
        %v1142 = vadd.f32 %v246, %v910
        %v1143 = vadd.f32 %v247, %v919
        %v1144 = vadd.f32 %v248, %v928
        %v1145 = vadd.f32 %v249, %v937
        %v1146 = vadd.f32 %v250, %v946
        %v1147 = vadd.f32 %v251, %v955
        %v1148 = vadd.f32 %v252, %v964
        %v1149 = vadd.f32 %v253, %v973
        %v1150 = vadd.f32 %v254, %v982
        %v1151 = vadd.f32 %v255, %v991
        %v1152 = vadd.f32 %v256, %v1000
        %v1153 = vadd.f32 %v257, %v1009
        %v1154 = vadd.f32 %v258, %v1018
        %v1155 = vadd.f32 %v259, %v1027
        %v1156 = vadd.f32 %v260, %v1036
        %v1157 = vadd.f32 %v261, %v1045
        %v1158 = vadd.f32 %v262, %v1054
        %v1159 = vadd.f32 %v263, %v1063
        %v1160 = vadd.f32 %v264, %v1072
        %v1161 = vadd.f32 %v265, %v1081
        %v1162 = vadd.f32 %v266, %v1090
        %v1163 = vadd.f32 %v267, %v1099
        %v1164 = vmax.f32 %v1100, 0.0001
        %v1165 = vmax.f32 %v1101, 0.0001
        %v1166 = vmax.f32 %v1102, 0.0001
        %v1167 = vmax.f32 %v1103, 0.0001
        %v1168 = vmax.f32 %v1104, 0.0001
        %v1169 = vmax.f32 %v1105, 0.0001
        %v1170 = vmax.f32 %v1106, 0.0001
        %v1171 = vmax.f32 %v1107, 0.0001
        %v1172 = vmax.f32 %v1108, 0.0001
        %v1173 = vmax.f32 %v1109, 0.0001
        %v1174 = vmax.f32 %v1110, 0.0001
        %v1175 = vmax.f32 %v1111, 0.0001
        %v1176 = vmax.f32 %v1112, 0.0001
        %v1177 = vmax.f32 %v1113, 0.0001
        %v1178 = vmax.f32 %v1114, 0.0001
        %v1179 = vmax.f32 %v1115, 0.0001
        %v1180 = vmax.f32 %v1116, 0.0001
        %v1181 = vmax.f32 %v1117, 0.0001
        %v1182 = vmax.f32 %v1118, 0.0001
        %v1183 = vmax.f32 %v1119, 0.0001
        %v1184 = vmax.f32 %v1120, 0.0001
        %v1185 = vmax.f32 %v1121, 0.0001
        %v1186 = vmax.f32 %v1122, 0.0001
        %v1187 = vmax.f32 %v1123, 0.0001
        %v1188 = vmax.f32 %v1124, 0.0001
        %v1189 = vmax.f32 %v1125, 0.0001
        %v1190 = vmax.f32 %v1126, 0.0001
        %v1191 = vmax.f32 %v1127, 0.0001
        %v1192 = vmax.f32 %v1128, 0.0001
        %v1193 = vmax.f32 %v1129, 0.0001
        %v1194 = vmax.f32 %v1130, 0.0001
        %v1195 = vmax.f32 %v1131, 0.0001
        %v1196 = vmax.f32 %v1132, 0.0001
        %v1197 = vmax.f32 %v1133, 0.0001
        %v1198 = vmax.f32 %v1134, 0.0001
        %v1199 = vmax.f32 %v1135, 0.0001
        %v1200 = vmax.f32 %v1136, 0.0001
        %v1201 = vmax.f32 %v1137, 0.0001
        %v1202 = vmax.f32 %v1138, 0.0001
        %v1203 = vmax.f32 %v1139, 0.0001
        %v1204 = vmax.f32 %v1140, 0.0001
        %v1205 = vmax.f32 %v1141, 0.0001
        %v1206 = vmax.f32 %v1142, 0.0001
        %v1207 = vmax.f32 %v1143, 0.0001
        %v1208 = vmax.f32 %v1144, 0.0001
        %v1209 = vmax.f32 %v1145, 0.0001
        %v1210 = vmax.f32 %v1146, 0.0001
        %v1211 = vmax.f32 %v1147, 0.0001
        %v1212 = vmax.f32 %v1148, 0.0001
        %v1213 = vmax.f32 %v1149, 0.0001
        %v1214 = vmax.f32 %v1150, 0.0001
        %v1215 = vmax.f32 %v1151, 0.0001
        %v1216 = vmax.f32 %v1152, 0.0001
        %v1217 = vmax.f32 %v1153, 0.0001
        %v1218 = vmax.f32 %v1154, 0.0001
        %v1219 = vmax.f32 %v1155, 0.0001
        %v1220 = vmax.f32 %v1156, 0.0001
        %v1221 = vmax.f32 %v1157, 0.0001
        %v1222 = vmax.f32 %v1158, 0.0001
        %v1223 = vmax.f32 %v1159, 0.0001
        %v1224 = vmax.f32 %v1160, 0.0001
        %v1225 = vmax.f32 %v1161, 0.0001
        %v1226 = vmax.f32 %v1162, 0.0001
        %v1227 = vmax.f32 %v1163, 0.0001
        %v1228 = vmin.f32 %v1164, 10000.0
        %v1229 = vmin.f32 %v1165, 10000.0
        %v1230 = vmin.f32 %v1166, 10000.0
        %v1231 = vmin.f32 %v1167, 10000.0
        %v1232 = vmin.f32 %v1168, 10000.0
        %v1233 = vmin.f32 %v1169, 10000.0
        %v1234 = vmin.f32 %v1170, 10000.0
        %v1235 = vmin.f32 %v1171, 10000.0
        %v1236 = vmin.f32 %v1172, 10000.0
        %v1237 = vmin.f32 %v1173, 10000.0
        %v1238 = vmin.f32 %v1174, 10000.0
        %v1239 = vmin.f32 %v1175, 10000.0
        %v1240 = vmin.f32 %v1176, 10000.0
        %v1241 = vmin.f32 %v1177, 10000.0
        %v1242 = vmin.f32 %v1178, 10000.0
        %v1243 = vmin.f32 %v1179, 10000.0
        %v1244 = vmin.f32 %v1180, 10000.0
        %v1245 = vmin.f32 %v1181, 10000.0
        %v1246 = vmin.f32 %v1182, 10000.0
        %v1247 = vmin.f32 %v1183, 10000.0
        %v1248 = vmin.f32 %v1184, 10000.0
        %v1249 = vmin.f32 %v1185, 10000.0
        %v1250 = vmin.f32 %v1186, 10000.0
        %v1251 = vmin.f32 %v1187, 10000.0
        %v1252 = vmin.f32 %v1188, 10000.0
        %v1253 = vmin.f32 %v1189, 10000.0
        %v1254 = vmin.f32 %v1190, 10000.0
        %v1255 = vmin.f32 %v1191, 10000.0
        %v1256 = vmin.f32 %v1192, 10000.0
        %v1257 = vmin.f32 %v1193, 10000.0
        %v1258 = vmin.f32 %v1194, 10000.0
        %v1259 = vmin.f32 %v1195, 10000.0
        %v1260 = vmin.f32 %v1196, 10000.0
        %v1261 = vmin.f32 %v1197, 10000.0
        %v1262 = vmin.f32 %v1198, 10000.0
        %v1263 = vmin.f32 %v1199, 10000.0
        %v1264 = vmin.f32 %v1200, 10000.0
        %v1265 = vmin.f32 %v1201, 10000.0
        %v1266 = vmin.f32 %v1202, 10000.0
        %v1267 = vmin.f32 %v1203, 10000.0
        %v1268 = vmin.f32 %v1204, 10000.0
        %v1269 = vmin.f32 %v1205, 10000.0
        %v1270 = vmin.f32 %v1206, 10000.0
        %v1271 = vmin.f32 %v1207, 10000.0
        %v1272 = vmin.f32 %v1208, 10000.0
        %v1273 = vmin.f32 %v1209, 10000.0
        %v1274 = vmin.f32 %v1210, 10000.0
        %v1275 = vmin.f32 %v1211, 10000.0
        %v1276 = vmin.f32 %v1212, 10000.0
        %v1277 = vmin.f32 %v1213, 10000.0
        %v1278 = vmin.f32 %v1214, 10000.0
        %v1279 = vmin.f32 %v1215, 10000.0
        %v1280 = vmin.f32 %v1216, 10000.0
        %v1281 = vmin.f32 %v1217, 10000.0
        %v1282 = vmin.f32 %v1218, 10000.0
        %v1283 = vmin.f32 %v1219, 10000.0
        %v1284 = vmin.f32 %v1220, 10000.0
        %v1285 = vmin.f32 %v1221, 10000.0
        %v1286 = vmin.f32 %v1222, 10000.0
        %v1287 = vmin.f32 %v1223, 10000.0
        %v1288 = vmin.f32 %v1224, 10000.0
        %v1289 = vmin.f32 %v1225, 10000.0
        %v1290 = vmin.f32 %v1226, 10000.0
        %v1291 = vmin.f32 %v1227, 10000.0
        %1292 = vst [vmem:[%s137] sm:$0xff] %v1228
        %1293 = vst [vmem:[%s137 + $0x8] sm:$0xff] %v1229
        %1294 = vst [vmem:[%s137 + $0x10] sm:$0xff] %v1230
        %1295 = vst [vmem:[%s137 + $0x18] sm:$0xff] %v1231
        %1296 = vst [vmem:[%s137 + $0x20] sm:$0xff] %v1232
        %1297 = vst [vmem:[%s137 + $0x28] sm:$0xff] %v1233
        %1298 = vst [vmem:[%s137 + $0x30] sm:$0xff] %v1234
        %1299 = vst [vmem:[%s137 + $0x38] sm:$0xff] %v1235
        %1300 = vst [vmem:[%s137 + $0x40] sm:$0xff] %v1236
        %1301 = vst [vmem:[%s137 + $0x48] sm:$0xff] %v1237
        %1302 = vst [vmem:[%s137 + $0x50] sm:$0xff] %v1238
        %1303 = vst [vmem:[%s137 + $0x58] sm:$0xff] %v1239
        %1304 = vst [vmem:[%s137 + $0x60] sm:$0xff] %v1240
        %1305 = vst [vmem:[%s137 + $0x68] sm:$0xff] %v1241
        %1306 = vst [vmem:[%s137 + $0x70] sm:$0xff] %v1242
        %1307 = vst [vmem:[%s137 + $0x78] sm:$0xff] %v1243
        %1308 = vst [vmem:[%s137 + $0x80] sm:$0xff] %v1244
        %1309 = vst [vmem:[%s137 + $0x88] sm:$0xff] %v1245
        %1310 = vst [vmem:[%s137 + $0x90] sm:$0xff] %v1246
        %1311 = vst [vmem:[%s137 + $0x98] sm:$0xff] %v1247
        %1312 = vst [vmem:[%s137 + $0xa0] sm:$0xff] %v1248
        %1313 = vst [vmem:[%s137 + $0xa8] sm:$0xff] %v1249
        %1314 = vst [vmem:[%s137 + $0xb0] sm:$0xff] %v1250
        %1315 = vst [vmem:[%s137 + $0xb8] sm:$0xff] %v1251
        %1316 = vst [vmem:[%s137 + $0xc0] sm:$0xff] %v1252
        %1317 = vst [vmem:[%s137 + $0xc8] sm:$0xff] %v1253
        %1318 = vst [vmem:[%s137 + $0xd0] sm:$0xff] %v1254
        %1319 = vst [vmem:[%s137 + $0xd8] sm:$0xff] %v1255
        %1320 = vst [vmem:[%s137 + $0xe0] sm:$0xff] %v1256
        %1321 = vst [vmem:[%s137 + $0xe8] sm:$0xff] %v1257
        %1322 = vst [vmem:[%s137 + $0xf0] sm:$0xff] %v1258
        %1323 = vst [vmem:[%s137 + $0xf8] sm:$0xff] %v1259
        %1324 = vst [vmem:[%s137 + $0x100] sm:$0xff] %v1260
        %1325 = vst [vmem:[%s137 + $0x108] sm:$0xff] %v1261
        %1326 = vst [vmem:[%s137 + $0x110] sm:$0xff] %v1262
        %1327 = vst [vmem:[%s137 + $0x118] sm:$0xff] %v1263
        %1328 = vst [vmem:[%s137 + $0x120] sm:$0xff] %v1264
        %1329 = vst [vmem:[%s137 + $0x128] sm:$0xff] %v1265
        %1330 = vst [vmem:[%s137 + $0x130] sm:$0xff] %v1266
        %1331 = vst [vmem:[%s137 + $0x138] sm:$0xff] %v1267
        %1332 = vst [vmem:[%s137 + $0x140] sm:$0xff] %v1268
        %1333 = vst [vmem:[%s137 + $0x148] sm:$0xff] %v1269
        %1334 = vst [vmem:[%s137 + $0x150] sm:$0xff] %v1270
        %1335 = vst [vmem:[%s137 + $0x158] sm:$0xff] %v1271
        %1336 = vst [vmem:[%s137 + $0x160] sm:$0xff] %v1272
        %1337 = vst [vmem:[%s137 + $0x168] sm:$0xff] %v1273
        %1338 = vst [vmem:[%s137 + $0x170] sm:$0xff] %v1274
        %1339 = vst [vmem:[%s137 + $0x178] sm:$0xff] %v1275
        %1340 = vst [vmem:[%s137 + $0x180] sm:$0xff] %v1276
        %1341 = vst [vmem:[%s137 + $0x188] sm:$0xff] %v1277
        %1342 = vst [vmem:[%s137 + $0x190] sm:$0xff] %v1278
        %1343 = vst [vmem:[%s137 + $0x198] sm:$0xff] %v1279
        %1344 = vst [vmem:[%s137 + $0x1a0] sm:$0xff] %v1280
        %1345 = vst [vmem:[%s137 + $0x1a8] sm:$0xff] %v1281
        %1346 = vst [vmem:[%s137 + $0x1b0] sm:$0xff] %v1282
        %1347 = vst [vmem:[%s137 + $0x1b8] sm:$0xff] %v1283
        %1348 = vst [vmem:[%s137 + $0x1c0] sm:$0xff] %v1284
        %1349 = vst [vmem:[%s137 + $0x1c8] sm:$0xff] %v1285
        %1350 = vst [vmem:[%s137 + $0x1d0] sm:$0xff] %v1286
        %1351 = vst [vmem:[%s137 + $0x1d8] sm:$0xff] %v1287
        %1352 = vst [vmem:[%s137 + $0x1e0] sm:$0xff] %v1288
        %1353 = vst [vmem:[%s137 + $0x1e8] sm:$0xff] %v1289
        %1354 = vst [vmem:[%s137 + $0x1f0] sm:$0xff] %v1290
        %1355 = vst [vmem:[%s137 + $0x1f8] sm:$0xff] %v1291
        %s1356 = sand.u32 %s52, 1
        %s1357 = scalar_lea.sflag [#allocation4], %s1356
        %s1358 = sand.u32 %s52, 1
        %s1359 = smul.addr %s1358, 512
        %s1360 = scalar_lea.vmem [#allocation5], %s1359
        // Predicated region
        $region29: #{tpu_custom_call.1} parent=23 // pred_check
          %p1361 = pneg %p62
        $region30: #{tpu_custom_call.1} parent=23 // pred_check_branch
          %1363 = sbr.rel (%p1361) target = $region32
        $region31: #{tpu_custom_call.1} parent=23 // pred_region
          %s1364 = smul.u32 16, %s18
          %1366 = vsyncadd %s1357, 0
          %s1367 = smul.addr %s1364, 4
          %s1368 = smul.addr %s1367, 8
          %s1369 = scalar_lea.hbm %s1, %s1368
          %s1370 = sshll.u32 %s1360, 4
          %s1371 = int_to_ptr.vmem [resolvable:$true] %s1370
          %s1372 = sshll.u32 %s1369, 4
          %s1373 = int_to_ptr.hbm [resolvable:$true] %s1372
          %1378 = dma.vmem_to_hbm [thread:$0]  %s1371, 8192, %s1373, %s1357, 512, 512, 32
        $region32: #{tpu_custom_call.1} parent=23 // pred_fallthru
          _
      $region24: #{tpu_custom_call.1} parent=5 // pred_fallthru
        _
      %p1379 = scmp.le.s32.totalorder 2, %s13
      // Predicated region
      $region33: #{tpu_custom_call.1} parent=5 // pred_check
        %p1380 = pneg %p1379
      $region34: #{tpu_custom_call.1} parent=5 // pred_check_branch
        %1382 = sbr.rel (%p1380) target = $region36
      $region35: #{tpu_custom_call.1} parent=5 // pred_region
        %s1383 = ssub.s32 %s13, 2
        // Predicated region
        $region37: #{tpu_custom_call.1} parent=35 // pred_check
          %p1384 = pneg %p68
        $region38: #{tpu_custom_call.1} parent=35 // pred_check_branch
          %1386 = sbr.rel (%p1384) target = $region40
        $region39: #{tpu_custom_call.1} parent=35 // pred_region
          %s1387 = sand.u32 %s53, 1
          %s1388 = scalar_lea.sflag [#allocation4], %s1387
          %s1389 = sand.u32 %s53, 1
          %s1390 = smul.addr %s1389, 512
          %s1391 = scalar_lea.vmem [#allocation5], %s1390
          %1393 = dma.done %s1388, 8192
        $region40: #{tpu_custom_call.1} parent=35 // pred_fallthru
          _
      $region36: #{tpu_custom_call.1} parent=5 // pred_fallthru
        _
    $region6: #{tpu_custom_call.1} parent=1 // loop_footer
      %s17 = sadd.s32 1, %s13
    $region7: #{tpu_custom_call.1} parent=1 // loop_footer_branch
      %12 = sbr.rel target = $region3
    $region8: #{tpu_custom_call.1} parent=1 // loop_exit
      _
    %1394 = vsyncpa [#allocation3], 1
    %s1395 = scalar_lea.sflag [#allocation3], 1
    %1396 = vsyncpa %s1395, 1
    %1397 = vsyncpa [#allocation4], 1
    %s1398 = scalar_lea.sflag [#allocation4], 1
    %1399 = vsyncpa %s1398, 1

</llo_original>
